<compile_context>
chip_gen: v6e
topology: v6e:2x2x1
jax: 0.10.0
libtpu: 0.0.40
codegen_flags: <defaults>
</compile_context>

<pallas_src>
import functools

import jax
import jax.numpy as jnp
from jax.experimental import pallas as pl
from jax.experimental.pallas import tpu as pltpu


def _prompt_extractor_kernel(x_ref, w_ref, o_ref, *, num_templates, use_bf16):
    """One noun tile.

    x_ref : (T, TN, W) — per-template EOT embeddings for this noun tile
    w_ref : (W, E)     — CLIP text_projection (resident across all tiles)
    o_ref : (TN, E)    — averaged + normalized text features for this tile
    """
    T = num_templates
    tn, _ = o_ref.shape
    x = x_ref[...]
    w = w_ref[...]
    wdim = x.shape[-1]

    # Fuse the T template matmuls: sublane-only flatten (TN is a multiple of
    # 8), then one (T*TN, W) @ (W, E) projection on the MXU.
    xf = x.reshape(T * tn, wdim)
    if use_bf16:
        feat = jnp.dot(xf.astype(jnp.bfloat16), w.astype(jnp.bfloat16),
                       preferred_element_type=jnp.float32)
    else:
        feat = jnp.dot(xf, w, preferred_element_type=jnp.float32)

    # Per-template: text_features /= text_features.norm(dim=-1, keepdim=True)
    # (the eps guard only protects all-zero padded noun rows; real rows are
    #  unchanged since their norm >> 1e-30).
    sumsq = jnp.sum(feat * feat, axis=-1, keepdims=True)
    feat = feat * jax.lax.rsqrt(jnp.maximum(sumsq, 1e-30))

    # stack(...).mean(dim=0) followed by L2 normalize: the 1/T scale cancels
    # under the final normalize, so sum the T sublane-aligned slabs with a
    # pairwise tree reduction.
    slabs = [feat[t * tn:(t + 1) * tn, :] for t in range(T)]
    while len(slabs) > 1:
        nxt = [slabs[i] + slabs[i + 1] for i in range(0, len(slabs) - 1, 2)]
        if len(slabs) % 2:
            nxt.append(slabs[-1])
        slabs = nxt
    acc = slabs[0]

    # Final: text_features / text_features.norm(dim=-1, keepdim=True)
    sumsq2 = jnp.sum(acc * acc, axis=-1, keepdims=True)
    o_ref[...] = (acc * jax.lax.rsqrt(jnp.maximum(sumsq2, 1e-30))).astype(
        o_ref.dtype)


def _round_up(x, m):
    return (x + m - 1) // m * m


def prompt_extractor(eot_embeddings, text_projection, *, noun_tile=128,
                     use_bf16_matmul=False):
    """eot_embeddings: [T, N, W] f32, text_projection: [W, E] f32 -> [N, E]."""
    T, N, W = eot_embeddings.shape
    W2, E = text_projection.shape
    assert W == W2

    # Noun tile: multiple of 8 (sublane), capped at `noun_tile` (sized so
    # 2 * T * TN * W * 4B stays well inside v7x's 64 MiB VMEM at CLIP widths).
    N8 = _round_up(max(N, 8), 8)
    TN = N8 if N8 <= noun_tile else noun_tile
    Np = _round_up(N8, TN)

    # Only the noun axis may need padding (single jnp.pad, usually a no-op).
    # W / E are carried as full-dim block axes, so no lane padding is needed;
    # real CLIP widths (512 / 768) are already multiples of 128.
    if Np != N:
        x = jnp.pad(eot_embeddings, ((0, 0), (0, Np - N), (0, 0)))
    else:
        x = eot_embeddings
    w = text_projection

    kernel = functools.partial(_prompt_extractor_kernel,
                               num_templates=T, use_bf16=use_bf16_matmul)

    out_padded = pl.pallas_call(
        kernel,
        out_shape=jax.ShapeDtypeStruct((Np, E), jnp.float32),
        grid=(Np // TN,),
        in_specs=[
            pl.BlockSpec((T, TN, W), lambda i: (0, i, 0)),
            pl.BlockSpec((W, E), lambda i: (0, 0)),   # resident across tiles
        ],
        out_specs=pl.BlockSpec((TN, E), lambda i: (i, 0)),
        compiler_params=pltpu.CompilerParams(
            dimension_semantics=("parallel",),
        ),
        cost_estimate=pl.CostEstimate(
            flops=2 * T * Np * W * E + 3 * (T + 1) * Np * E,
            transcendentals=(T + 1) * Np,
            bytes_accessed=4 * (T * Np * W + W * E + Np * E),
        ),
    )(x, w)

    if Np != N:
        out_padded = out_padded[:N]
    return out_padded


def prompt_extractor_ref(eot_embeddings, text_projection):
    """Pure-JAX reference mirroring the PyTorch forward."""
    feats = jnp.einsum("tnw,we->tne", eot_embeddings, text_projection)
    feats = feats / jnp.linalg.norm(feats, axis=-1, keepdims=True)
    mean = feats.mean(axis=0)
    return mean / jnp.linalg.norm(mean, axis=-1, keepdims=True)


if __name__ == "__main__":
    VILD_PROMPT_LEN = 14     # number of templates in VILD_PROMPT
    NUM_NOUNS = 8            # len(noun_list)
    WIDTH = 32               # CLIP transformer width (EOT embedding dim)
    EMBED = 32               # joint embedding dim (text_projection output)

    key = jax.random.PRNGKey(0)
    k_x, k_w = jax.random.split(key)

    # Deterministic synthetic "encoder outputs" and projection weight.
    eot_embeddings = jax.random.normal(
        k_x, (VILD_PROMPT_LEN, NUM_NOUNS, WIDTH), dtype=jnp.float32)
    text_projection = (
        jax.random.normal(k_w, (WIDTH, EMBED), dtype=jnp.float32) * (WIDTH ** -0.5)
    )

    out = prompt_extractor(eot_embeddings, text_projection)
    out = jax.block_until_ready(out)

    ref = prompt_extractor_ref(eot_embeddings, text_projection)
    assert out.shape == (NUM_NOUNS, EMBED)
    assert jnp.allclose(out, ref, atol=1e-5, rtol=1e-5), "mismatch vs reference"

    print("KERNEL_OK")
</pallas_src>

<mosaic_0001>
module attributes {stable_mosaic.version = 11 : i64} {
  func.func @_prompt_extractor_kernel(%arg0: i32, %arg1: memref<14x8x32xf32, #tpu.memory_space<vmem>>, %arg2: memref<32x32xf32, #tpu.memory_space<vmem>>, %arg3: memref<8x32xf32, #tpu.memory_space<vmem>>) attributes {dimension_semantics = [#tpu.dimension_semantics<parallel>], iteration_bounds = array<i64: 1>, scalar_prefetch = 0 : i64, scratch_operands = 0 : i64, tpu.core_type = #tpu.core_type<tc>, window_params = [{transform_indices = @transform_0, window_bounds = array<i64: 14, 8, 32>}, {pipeline_mode = #tpu.pipeline_mode<synchronous>, transform_indices = @transform_1, window_bounds = array<i64: 32, 32>}, {transform_indices = @transform_2, window_bounds = array<i64: 8, 32>}]} {
    %c0 = arith.constant 0 : index
    %c0_0 = arith.constant 0 : index
    %c0_1 = arith.constant 0 : index
    %0 = vector.load %arg1[%c0, %c0_0, %c0_1] : memref<14x8x32xf32, #tpu.memory_space<vmem>>, vector<14x8x32xf32>
    %c0_2 = arith.constant 0 : index
    %c0_3 = arith.constant 0 : index
    %1 = vector.load %arg2[%c0_2, %c0_3] : memref<32x32xf32, #tpu.memory_space<vmem>>, vector<32x32xf32>
    %2 = vector.shape_cast %0 : vector<14x8x32xf32> to vector<112x32xf32>
    %cst = arith.constant dense<0.000000e+00> : vector<112x32xf32>
    %3 = tpu.matmul %2, %1, %cst {dimension_numbers = #tpu.dot_dimension_numbers<[1], [0], [0], [1], [0, 0, 1, 1], [], []>} : vector<112x32xf32>, vector<32x32xf32>, vector<112x32xf32> -> vector<112x32xf32>
    %4 = arith.mulf %3, %3 : vector<112x32xf32>
    %cst_4 = arith.constant dense<0.000000e+00> : vector<112xf32>
    %5 = vector.multi_reduction <add>, %4, %cst_4 [1] : vector<112x32xf32> to vector<112xf32>
    %6 = vector.shape_cast %5 : vector<112xf32> to vector<112x1xf32>
    %cst_5 = arith.constant 1.000000e-30 : f32
    %7 = vector.broadcast %cst_5 : f32 to vector<112x1xf32>
    %8 = arith.maximumf %6, %7 : vector<112x1xf32>
    %9 = math.rsqrt %8 : vector<112x1xf32>
    %10 = vector.broadcast %9 : vector<112x1xf32> to vector<112x32xf32>
    %11 = arith.mulf %3, %10 : vector<112x32xf32>
    %12 = vector.extract_strided_slice %11 {offsets = [0, 0], sizes = [8, 32], strides = [1, 1]} : vector<112x32xf32> to vector<8x32xf32>
    %13 = vector.extract_strided_slice %11 {offsets = [8, 0], sizes = [8, 32], strides = [1, 1]} : vector<112x32xf32> to vector<8x32xf32>
    %14 = vector.extract_strided_slice %11 {offsets = [16, 0], sizes = [8, 32], strides = [1, 1]} : vector<112x32xf32> to vector<8x32xf32>
    %15 = vector.extract_strided_slice %11 {offsets = [24, 0], sizes = [8, 32], strides = [1, 1]} : vector<112x32xf32> to vector<8x32xf32>
    %16 = vector.extract_strided_slice %11 {offsets = [32, 0], sizes = [8, 32], strides = [1, 1]} : vector<112x32xf32> to vector<8x32xf32>
    %17 = vector.extract_strided_slice %11 {offsets = [40, 0], sizes = [8, 32], strides = [1, 1]} : vector<112x32xf32> to vector<8x32xf32>
    %18 = vector.extract_strided_slice %11 {offsets = [48, 0], sizes = [8, 32], strides = [1, 1]} : vector<112x32xf32> to vector<8x32xf32>
    %19 = vector.extract_strided_slice %11 {offsets = [56, 0], sizes = [8, 32], strides = [1, 1]} : vector<112x32xf32> to vector<8x32xf32>
    %20 = vector.extract_strided_slice %11 {offsets = [64, 0], sizes = [8, 32], strides = [1, 1]} : vector<112x32xf32> to vector<8x32xf32>
    %21 = vector.extract_strided_slice %11 {offsets = [72, 0], sizes = [8, 32], strides = [1, 1]} : vector<112x32xf32> to vector<8x32xf32>
    %22 = vector.extract_strided_slice %11 {offsets = [80, 0], sizes = [8, 32], strides = [1, 1]} : vector<112x32xf32> to vector<8x32xf32>
    %23 = vector.extract_strided_slice %11 {offsets = [88, 0], sizes = [8, 32], strides = [1, 1]} : vector<112x32xf32> to vector<8x32xf32>
    %24 = vector.extract_strided_slice %11 {offsets = [96, 0], sizes = [8, 32], strides = [1, 1]} : vector<112x32xf32> to vector<8x32xf32>
    %25 = vector.extract_strided_slice %11 {offsets = [104, 0], sizes = [8, 32], strides = [1, 1]} : vector<112x32xf32> to vector<8x32xf32>
    %26 = arith.addf %12, %13 : vector<8x32xf32>
    %27 = arith.addf %14, %15 : vector<8x32xf32>
    %28 = arith.addf %16, %17 : vector<8x32xf32>
    %29 = arith.addf %18, %19 : vector<8x32xf32>
    %30 = arith.addf %20, %21 : vector<8x32xf32>
    %31 = arith.addf %22, %23 : vector<8x32xf32>
    %32 = arith.addf %24, %25 : vector<8x32xf32>
    %33 = arith.addf %26, %27 : vector<8x32xf32>
    %34 = arith.addf %28, %29 : vector<8x32xf32>
    %35 = arith.addf %30, %31 : vector<8x32xf32>
    %36 = arith.addf %33, %34 : vector<8x32xf32>
    %37 = arith.addf %35, %32 : vector<8x32xf32>
    %38 = arith.addf %36, %37 : vector<8x32xf32>
    %39 = arith.mulf %38, %38 : vector<8x32xf32>
    %cst_6 = arith.constant dense<0.000000e+00> : vector<8xf32>
    %40 = vector.multi_reduction <add>, %39, %cst_6 [1] : vector<8x32xf32> to vector<8xf32>
    %41 = vector.shape_cast %40 : vector<8xf32> to vector<8x1xf32>
    %cst_7 = arith.constant 1.000000e-30 : f32
    %42 = vector.broadcast %cst_7 : f32 to vector<8x1xf32>
    %43 = arith.maximumf %41, %42 : vector<8x1xf32>
    %44 = math.rsqrt %43 : vector<8x1xf32>
    %45 = vector.broadcast %44 : vector<8x1xf32> to vector<8x32xf32>
    %46 = arith.mulf %38, %45 : vector<8x32xf32>
    %c0_8 = arith.constant 0 : index
    %c0_9 = arith.constant 0 : index
    %47 = vector.load %arg3[%c0_8, %c0_9] : memref<8x32xf32, #tpu.memory_space<vmem>>, vector<8x32xf32>
    tpu.vector_store %arg3[%c0_8, %c0_9], %46 {strides = array<i32>} : memref<8x32xf32, #tpu.memory_space<vmem>>, vector<8x32xf32>,
    return
  }
  func.func @transform_0(%arg0: i32) -> (i32, i32, i32) {
    %c0_i32 = arith.constant 0 : i32
    %c0_i32_0 = arith.constant 0 : i32
    %c0_i32_1 = arith.constant 0 : i32
    return %c0_i32, %arg0, %c0_i32_0 : i32, i32, i32
  }
  func.func @transform_1(%arg0: i32) -> (i32, i32) {
    %c0_i32 = arith.constant 0 : i32
    %c0_i32_0 = arith.constant 0 : i32
    %c0_i32_1 = arith.constant 0 : i32
    return %c0_i32, %c0_i32_0 : i32, i32
  }
  func.func @transform_2(%arg0: i32) -> (i32, i32) {
    %c0_i32 = arith.constant 0 : i32
    %c0_i32_0 = arith.constant 0 : i32
    return %arg0, %c0_i32 : i32, i32
  }
}

</mosaic_0001>

<llo_original>
// kernel: tpu_custom_call.1
$region0: #{tpu_custom_call.1}
  #allocation0 [shape = 'u32[]', space=smem, size = 0x4, offset = 0x4, fixed_abs, tag = 'smem constant byte address 0x4 - core index']
  #allocation1 [shape = 'u32[144,128]{1,0:T(1,128)}', space=vmem, size = 0x12000, scoped, tag = 'internal scratch']
  %s0 = inlined_call_operand.hbm [shape: f32[14,8,32], index: 0, kind: input, shape index: {}]
  %s1 = inlined_call_operand.hbm [shape: f32[32,32], index: 1, kind: input, shape index: {}]
  %s2 = inlined_call_operand.hbm [shape: f32[8,32], index: 2, kind: output, shape index: {}]
  %s3 = sld [smem:[#allocation0]]
  $region26: #{tpu_custom_call.1} parent=0
    _
  %s5 = ssub.s32 1, %s3
  %s6 = scalar_select 0, %s5, %s3
  $region1: #{tpu_custom_call.1} parent=0
    #allocation2 [shape = 'u8[57344]{0}', space=vmem, size = 0xe000, scoped, tag = 'input window, operand 0, single buffered']
    #allocation3 [shape = 's32[1]{0}', space=sflag, size = 0x4, scoped, tag = 'scoped memory for tpu_custom_call.1']
    #allocation4 [shape = 's32[1]{0}', space=sflag, size = 0x4, scoped, tag = 'scoped memory for tpu_custom_call.1']
    #allocation5 [shape = 'u8[16384]{0}', space=vmem, size = 0x4000, scoped, tag = 'input window, operand 1, single buffered']
    #allocation6 [shape = 's32[1]{0}', space=sflag, size = 0x4, scoped, tag = 'scoped memory for tpu_custom_call.1']
    #allocation7 [shape = 'u8[4096]{0}', space=vmem, size = 0x1000, scoped, tag = 'output window, operand 0, single buffered']
    %7 = vsyncpa [#allocation3], 0
    %8 = vsyncpa [#allocation6], 0
    %9 = vsyncpa [#allocation4], 0
    // Predicated region
    $region2: #{tpu_custom_call.1} parent=1 // pred_check
      _
    $region3: #{tpu_custom_call.1} parent=1 // pred_check_branch
      %11 = sbr.rel (0) target = $region5
    $region4: #{tpu_custom_call.1} parent=1 // pred_region
      %s13 = ssub.s32 1792, 1792
      %14 = vsyncadd [#allocation3], %s13
      %s15 = sshll.u32 [#allocation2], 4
      %s16 = int_to_ptr.vmem [resolvable:$true] %s15
      %21 = dma.hbm_to_vmem [thread:$0]  %s0, 1792, %s16, [#allocation3], 128, 128, 8
    $region5: #{tpu_custom_call.1} parent=1 // pred_fallthru
      _
    // Predicated region
    $region6: #{tpu_custom_call.1} parent=1 // pred_check
      _
    $region7: #{tpu_custom_call.1} parent=1 // pred_check_branch
      %23 = sbr.rel (0) target = $region9
    $region8: #{tpu_custom_call.1} parent=1 // pred_region
      %s25 = ssub.s32 512, 512
      %26 = vsyncadd [#allocation6], %s25
      %s27 = sshll.u32 [#allocation5], 4
      %s28 = int_to_ptr.vmem [resolvable:$true] %s27
      %33 = dma.hbm_to_vmem [thread:$0]  %s1, 512, %s28, [#allocation6], 128, 128, 8
    $region9: #{tpu_custom_call.1} parent=1 // pred_fallthru
      _
    // Predicated region
    $region10: #{tpu_custom_call.1} parent=1 // pred_check
      _
    $region11: #{tpu_custom_call.1} parent=1 // pred_check_branch
      %35 = sbr.rel (0) target = $region13
    $region12: #{tpu_custom_call.1} parent=1 // pred_region
      %36 = dma.done [#allocation3], 1792
    $region13: #{tpu_custom_call.1} parent=1 // pred_fallthru
      _
    // Predicated region
    $region14: #{tpu_custom_call.1} parent=1 // pred_check
      _
    $region15: #{tpu_custom_call.1} parent=1 // pred_check_branch
      %38 = sbr.rel (0) target = $region17
    $region16: #{tpu_custom_call.1} parent=1 // pred_region
      %39 = dma.done [#allocation6], 512
    $region17: #{tpu_custom_call.1} parent=1 // pred_fallthru
      _
    %v40 = vld [vmem:[#allocation2] sm:$0xff]
    %v41 = vld [vmem:[#allocation2 + $0x8] sm:$0xff]
    %v42 = vld [vmem:[#allocation2 + $0x10] sm:$0xff]
    %v43 = vld [vmem:[#allocation2 + $0x18] sm:$0xff]
    %v44 = vld [vmem:[#allocation2 + $0x20] sm:$0xff]
    %v45 = vld [vmem:[#allocation2 + $0x28] sm:$0xff]
    %v46 = vld [vmem:[#allocation2 + $0x30] sm:$0xff]
    %v47 = vld [vmem:[#allocation2 + $0x38] sm:$0xff]
    %v48 = vld [vmem:[#allocation2 + $0x40] sm:$0xff]
    %v49 = vld [vmem:[#allocation2 + $0x48] sm:$0xff]
    %v50 = vld [vmem:[#allocation2 + $0x50] sm:$0xff]
    %v51 = vld [vmem:[#allocation2 + $0x58] sm:$0xff]
    %v52 = vld [vmem:[#allocation2 + $0x60] sm:$0xff]
    %v53 = vld [vmem:[#allocation2 + $0x68] sm:$0xff]
    %v54 = vld [vmem:[#allocation5] sm:$0xff]
    %v55 = vld [vmem:[#allocation5 + $0x8] sm:$0xff]
    %v56 = vld [vmem:[#allocation5 + $0x10] sm:$0xff]
    %v57 = vld [vmem:[#allocation5 + $0x18] sm:$0xff]
    %vm58 = vcmask 261120
    %v60 = vsel %vm58, %v40, 0
    %v63 = vsel %vm58, %v41, 0
    %v66 = vsel %vm58, %v42, 0
    %v69 = vsel %vm58, %v43, 0
    %v72 = vsel %vm58, %v44, 0
    %v75 = vsel %vm58, %v45, 0
    %v78 = vsel %vm58, %v46, 0
    %v81 = vsel %vm58, %v47, 0
    %v84 = vsel %vm58, %v48, 0
    %v87 = vsel %vm58, %v49, 0
    %v90 = vsel %vm58, %v50, 0
    %v93 = vsel %vm58, %v51, 0
    %v96 = vsel %vm58, %v52, 0
    %v99 = vsel %vm58, %v53, 0
    %101 = vmatprep.subr.mxu0 0.0
    %102 = vmatpush1.msra.mxu0 0.0
    %103 = vmatprep.subr.mxu0 0.0
    %104 = vmatpush1.msra.mxu0 0.0
    %105 = vmatprep.subr.mxu0 0.0
    %106 = vmatpush1.msra.mxu0 0.0
    %107 = vmatprep.subr.mxu0 0.0
    %108 = vmatpush1.msra.mxu0 0.0
    %109 = vmatprep.subr.mxu0 0.0
    %110 = vmatpush1.msra.mxu0 0.0
    %111 = vmatprep.subr.mxu0 0.0
    %112 = vmatpush1.msra.mxu0 0.0
    %113 = vmatprep.subr.mxu0 0.0
    %114 = vmatpush1.msra.mxu0 0.0
    %115 = vmatprep.subr.mxu0 0.0
    %116 = vmatpush1.msra.mxu0 0.0
    %117 = vmatprep.subr.mxu0 0.0
    %118 = vmatpush1.msra.mxu0 0.0
    %119 = vmatprep.subr.mxu0 0.0
    %120 = vmatpush1.msra.mxu0 0.0
    %121 = vmatprep.subr.mxu0 0.0
    %122 = vmatpush1.msra.mxu0 0.0
    %123 = vmatprep.subr.mxu0 0.0
    %124 = vmatpush1.msra.mxu0 0.0
    %125 = vmatprep.subr.mxu0 0.0
    %126 = vmatpush1.msra.mxu0 %v57
    %127 = vmatprep.subr.mxu0 0.0
    %128 = vmatpush1.msra.mxu0 %v56
    %129 = vmatprep.subr.mxu0 0.0
    %130 = vmatpush1.msra.mxu0 %v55
    %131 = vmatprep.subr.mxu0 0.0
    %132 = vmatpush1.msra.mxu0 %v54
    %133 = vmatprep.subr.mxu0 0.0
    %134 = vmatpush2.msra.mxu0 0.0
    %135 = vmatprep.subr.mxu0 0.0
    %136 = vmatpush2.msra.mxu0 0.0
    %137 = vmatprep.subr.mxu0 0.0
    %138 = vmatpush2.msra.mxu0 0.0
    %139 = vmatprep.subr.mxu0 0.0
    %140 = vmatpush2.msra.mxu0 0.0
    %141 = vmatprep.subr.mxu0 0.0
    %142 = vmatpush2.msra.mxu0 0.0
    %143 = vmatprep.subr.mxu0 0.0
    %144 = vmatpush2.msra.mxu0 0.0
    %145 = vmatprep.subr.mxu0 0.0
    %146 = vmatpush2.msra.mxu0 0.0
    %147 = vmatprep.subr.mxu0 0.0
    %148 = vmatpush2.msra.mxu0 0.0
    %149 = vmatprep.subr.mxu0 0.0
    %150 = vmatpush2.msra.mxu0 0.0
    %151 = vmatprep.subr.mxu0 0.0
    %152 = vmatpush2.msra.mxu0 0.0
    %153 = vmatprep.subr.mxu0 0.0
    %154 = vmatpush2.msra.mxu0 0.0
    %155 = vmatprep.subr.mxu0 0.0
    %156 = vmatpush2.msra.mxu0 0.0
    %157 = vmatprep.subr.mxu0 0.0
    %158 = vmatpush2.msra.mxu0 0.0
    %159 = vmatprep.subr.mxu0 0.0
    %160 = vmatpush2.msra.mxu0 0.0
    %161 = vmatprep.subr.mxu0 0.0
    %162 = vmatpush2.msra.mxu0 0.0
    %163 = vmatprep.subr.mxu0 0.0
    %164 = vmatpush2.msra.mxu0 0.0
    %165 = vmatprep.mubr.f32.mxu0 0.0
    %166 = vmatmul.mubr.f32.gmra.mxu0 %v60
    %v167 = vpop.f32.mrf.mxu0
    %v168 = vadd.f32 0.0, %v167
    %v169 = vpop.f32.mrf.mxu0
    %170 = vmatprep.mubr.f32.mxu0 0.0
    %171 = vmatmul.mubr.f32.gmra.mxu0 %v63
    %v172 = vpop.f32.mrf.mxu0
    %v173 = vadd.f32 0.0, %v172
    %v174 = vpop.f32.mrf.mxu0
    %175 = vmatprep.mubr.f32.mxu0 0.0
    %176 = vmatmul.mubr.f32.gmra.mxu0 %v66
    %v177 = vpop.f32.mrf.mxu0
    %v178 = vadd.f32 0.0, %v177
    %v179 = vpop.f32.mrf.mxu0
    %180 = vmatprep.mubr.f32.mxu0 0.0
    %181 = vmatmul.mubr.f32.gmra.mxu0 %v69
    %v182 = vpop.f32.mrf.mxu0
    %v183 = vadd.f32 0.0, %v182
    %v184 = vpop.f32.mrf.mxu0
    %185 = vmatprep.mubr.f32.mxu0 0.0
    %186 = vmatmul.mubr.f32.gmra.mxu0 %v72
    %v187 = vpop.f32.mrf.mxu0
    %v188 = vadd.f32 0.0, %v187
    %v189 = vpop.f32.mrf.mxu0
    %190 = vmatprep.mubr.f32.mxu0 0.0
    %191 = vmatmul.mubr.f32.gmra.mxu0 %v75
    %v192 = vpop.f32.mrf.mxu0
    %v193 = vadd.f32 0.0, %v192
    %v194 = vpop.f32.mrf.mxu0
    %195 = vmatprep.mubr.f32.mxu0 0.0
    %196 = vmatmul.mubr.f32.gmra.mxu0 %v78
    %v197 = vpop.f32.mrf.mxu0
    %v198 = vadd.f32 0.0, %v197
    %v199 = vpop.f32.mrf.mxu0
    %200 = vmatprep.mubr.f32.mxu0 0.0
    %201 = vmatmul.mubr.f32.gmra.mxu0 %v81
    %v202 = vpop.f32.mrf.mxu0
    %v203 = vadd.f32 0.0, %v202
    %v204 = vpop.f32.mrf.mxu0
    %205 = vmatprep.mubr.f32.mxu0 0.0
    %206 = vmatmul.mubr.f32.gmra.mxu0 %v84
    %v207 = vpop.f32.mrf.mxu0
    %v208 = vadd.f32 0.0, %v207
    %v209 = vpop.f32.mrf.mxu0
    %210 = vmatprep.mubr.f32.mxu0 0.0
    %211 = vmatmul.mubr.f32.gmra.mxu0 %v87
    %v212 = vpop.f32.mrf.mxu0
    %v213 = vadd.f32 0.0, %v212
    %v214 = vpop.f32.mrf.mxu0
    %215 = vmatprep.mubr.f32.mxu0 0.0
    %216 = vmatmul.mubr.f32.gmra.mxu0 %v90
    %v217 = vpop.f32.mrf.mxu0
    %v218 = vadd.f32 0.0, %v217
    %v219 = vpop.f32.mrf.mxu0
    %220 = vmatprep.mubr.f32.mxu0 0.0
    %221 = vmatmul.mubr.f32.gmra.mxu0 %v93
    %v222 = vpop.f32.mrf.mxu0
    %v223 = vadd.f32 0.0, %v222
    %v224 = vpop.f32.mrf.mxu0
    %225 = vmatprep.mubr.f32.mxu0 0.0
    %226 = vmatmul.mubr.f32.gmra.mxu0 %v96
    %v227 = vpop.f32.mrf.mxu0
    %v228 = vadd.f32 0.0, %v227
    %v229 = vpop.f32.mrf.mxu0
    %230 = vmatprep.mubr.f32.mxu0 0.0
    %231 = vmatmul.mubr.f32.gmra.mxu0 %v99
    %v232 = vpop.f32.mrf.mxu0
    %v233 = vadd.f32 0.0, %v232
    %v234 = vpop.f32.mrf.mxu0
    %235 = vdwg.mxu0
    %v236 = vmul.f32 %v168, %v168
    %v237 = vmul.f32 %v173, %v173
    %v238 = vmul.f32 %v178, %v178
    %v239 = vmul.f32 %v183, %v183
    %v240 = vmul.f32 %v188, %v188
    %v241 = vmul.f32 %v193, %v193
    %v242 = vmul.f32 %v198, %v198
    %v243 = vmul.f32 %v203, %v203
    %v244 = vmul.f32 %v208, %v208
    %v245 = vmul.f32 %v213, %v213
    %v246 = vmul.f32 %v218, %v218
    %v247 = vmul.f32 %v223, %v223
    %v248 = vmul.f32 %v228, %v228
    %v249 = vmul.f32 %v233, %v233
    %v250 = vsel %vm58, %v236, 0.0
    %251 = vadd.xlane.f32.xlu0 %v250
    %v252 = vpop.xlane.xlu0 %251
    %v253 = vsel %vm58, %v237, 0.0
    %254 = vadd.xlane.f32.xlu0 %v253
    %v255 = vpop.xlane.xlu0 %254
    %v256 = vsel %vm58, %v238, 0.0
    %257 = vadd.xlane.f32.xlu0 %v256
    %v258 = vpop.xlane.xlu0 %257
    %v259 = vsel %vm58, %v239, 0.0
    %260 = vadd.xlane.f32.xlu0 %v259
    %v261 = vpop.xlane.xlu0 %260
    %v262 = vsel %vm58, %v240, 0.0
    %263 = vadd.xlane.f32.xlu0 %v262
    %v264 = vpop.xlane.xlu0 %263
    %v265 = vsel %vm58, %v241, 0.0
    %266 = vadd.xlane.f32.xlu0 %v265
    %v267 = vpop.xlane.xlu0 %266
    %v268 = vsel %vm58, %v242, 0.0
    %269 = vadd.xlane.f32.xlu0 %v268
    %v270 = vpop.xlane.xlu0 %269
    %v271 = vsel %vm58, %v243, 0.0
    %272 = vadd.xlane.f32.xlu0 %v271
    %v273 = vpop.xlane.xlu0 %272
    %v274 = vsel %vm58, %v244, 0.0
    %275 = vadd.xlane.f32.xlu0 %v274
    %v276 = vpop.xlane.xlu0 %275
    %v277 = vsel %vm58, %v245, 0.0
    %278 = vadd.xlane.f32.xlu0 %v277
    %v279 = vpop.xlane.xlu0 %278
    %v280 = vsel %vm58, %v246, 0.0
    %281 = vadd.xlane.f32.xlu0 %v280
    %v282 = vpop.xlane.xlu0 %281
    %v283 = vsel %vm58, %v247, 0.0
    %284 = vadd.xlane.f32.xlu0 %v283
    %v285 = vpop.xlane.xlu0 %284
    %v286 = vsel %vm58, %v248, 0.0
    %287 = vadd.xlane.f32.xlu0 %v286
    %v288 = vpop.xlane.xlu0 %287
    %v289 = vsel %vm58, %v249, 0.0
    %290 = vadd.xlane.f32.xlu0 %v289
    %v291 = vpop.xlane.xlu0 %290
    %v292 = vmax.f32 %v252, 1e-30
    %v293 = vmax.f32 %v255, 1e-30
    %v294 = vmax.f32 %v258, 1e-30
    %v295 = vmax.f32 %v261, 1e-30
    %v296 = vmax.f32 %v264, 1e-30
    %v297 = vmax.f32 %v267, 1e-30
    %v298 = vmax.f32 %v270, 1e-30
    %v299 = vmax.f32 %v273, 1e-30
    %v300 = vmax.f32 %v276, 1e-30
    %v301 = vmax.f32 %v279, 1e-30
    %v302 = vmax.f32 %v282, 1e-30
    %v303 = vmax.f32 %v285, 1e-30
    %v304 = vmax.f32 %v288, 1e-30
    %v305 = vmax.f32 %v291, 1e-30
    %v306 = vrsqrt.pop %v292
    %v307 = vrsqrt.pop %v293
    %v308 = vrsqrt.pop %v294
    %v309 = vrsqrt.pop %v295
    %v310 = vrsqrt.pop %v296
    %v311 = vrsqrt.pop %v297
    %v312 = vrsqrt.pop %v298
    %v313 = vrsqrt.pop %v299
    %v314 = vrsqrt.pop %v300
    %v315 = vrsqrt.pop %v301
    %v316 = vrsqrt.pop %v302
    %v317 = vrsqrt.pop %v303
    %v318 = vrsqrt.pop %v304
    %v319 = vrsqrt.pop %v305
    %v320 = vmul.f32 %v168, %v306
    %v321 = vmul.f32 %v173, %v307
    %v322 = vmul.f32 %v178, %v308
    %v323 = vmul.f32 %v183, %v309
    %v324 = vmul.f32 %v188, %v310
    %v325 = vmul.f32 %v193, %v311
    %v326 = vmul.f32 %v198, %v312
    %v327 = vmul.f32 %v203, %v313
    %v328 = vmul.f32 %v208, %v314
    %v329 = vmul.f32 %v213, %v315
    %v330 = vmul.f32 %v218, %v316
    %v331 = vmul.f32 %v223, %v317
    %v332 = vmul.f32 %v228, %v318
    %v333 = vmul.f32 %v233, %v319
    %v334 = vadd.f32 %v320, %v321
    %v335 = vadd.f32 %v322, %v323
    %v336 = vadd.f32 %v324, %v325
    %v337 = vadd.f32 %v326, %v327
    %v338 = vadd.f32 %v328, %v329
    %v339 = vadd.f32 %v330, %v331
    %v340 = vadd.f32 %v332, %v333
    %v341 = vadd.f32 %v334, %v335
    %v342 = vadd.f32 %v336, %v337
    %v343 = vadd.f32 %v338, %v339
    %v344 = vadd.f32 %v341, %v342
    %v345 = vadd.f32 %v343, %v340
    %v346 = vadd.f32 %v344, %v345
    %v347 = vmul.f32 %v346, %v346
    %v348 = vsel %vm58, %v347, 0.0
    %349 = vadd.xlane.f32.xlu0 %v348
    %v350 = vpop.xlane.xlu0 %349
    %v351 = vmax.f32 %v350, 1e-30
    %v352 = vrsqrt.pop %v351
    %v353 = vmul.f32 %v346, %v352
    %354 = vst.msk [vmem:[#allocation7] sm:$0xff] %vm58, %v353
    // Predicated region
    $region18: #{tpu_custom_call.1} parent=1 // pred_check
      _
    $region19: #{tpu_custom_call.1} parent=1 // pred_check_branch
      %356 = sbr.rel (0) target = $region21
    $region20: #{tpu_custom_call.1} parent=1 // pred_region
      %s358 = ssub.s32 128, 128
      %359 = vsyncadd [#allocation4], %s358
      %s361 = sshll.u32 [#allocation7], 4
      %s362 = int_to_ptr.vmem [resolvable:$true] %s361
      %364 = dma.vmem_to_hbm [thread:$0]  %s362, 128, %s2, [#allocation4]
    $region21: #{tpu_custom_call.1} parent=1 // pred_fallthru
      _
    // Predicated region
    $region22: #{tpu_custom_call.1} parent=1 // pred_check
      _
    $region23: #{tpu_custom_call.1} parent=1 // pred_check_branch
      %366 = sbr.rel (0) target = $region25
    $region24: #{tpu_custom_call.1} parent=1 // pred_region
      %367 = dma.done [#allocation4], 128
    $region25: #{tpu_custom_call.1} parent=1 // pred_fallthru
      _
    %368 = vsyncpa [#allocation3], 1
    %369 = vsyncpa [#allocation6], 1
    %370 = vsyncpa [#allocation4], 1

</llo_original>
